<compile_context>
chip_gen: v7x
topology: tpu7x:2x2x1
jax: 0.10.0
libtpu: 0.0.40
codegen_flags: <defaults>
</compile_context>

<pallas_src>
import functools

import jax
import jax.numpy as jnp
from jax.experimental import pallas as pl
from jax.experimental.pallas import tpu as pltpu


def _round_up(n, m):
    return ((n + m - 1) // m) * m


def _vmem_capacity_bytes():
    """Generation-aware VMEM capacity (v5e/v6e: 128 MiB, v7x: 64 MiB / TC)."""
    try:
        cap = int(pltpu.get_tpu_info().vmem_capacity_bytes)
        if cap > 0:
            return cap
    except Exception:
        pass
    return 64 << 20  # conservative fallback (v7x per-TensorCore size)


def _sublane_multiple(dtype):
    itemsize = jnp.dtype(dtype).itemsize
    if itemsize >= 4:
        return 8
    if itemsize == 2:
        return 16
    return 32


# ----------------------------------------------------------------------------
# Deterministic parameter init (mirrors nn.init.orthogonal_ / constant_(0)).
# ----------------------------------------------------------------------------
def orthogonal_(key, out_dim, in_dim, gain=1.0, dtype=jnp.float32):
    """Deterministic orthogonal init, same semantics as torch orthogonal_."""
    flat = jax.random.normal(key, (max(out_dim, in_dim), min(out_dim, in_dim)),
                             dtype=jnp.float32)
    q, r = jnp.linalg.qr(flat)
    q = q * jnp.sign(jnp.diag(r))[None, :]  # sign fix -> unique decomposition
    if out_dim < in_dim:
        q = q.T
    return (gain * q[:out_dim, :in_dim]).astype(dtype)


def init_mlp_params(key, shape, gain_out=1.0, dtype=jnp.float32):
    """shape = (d0, d1, ..., dL). Returns list of (W[out,in], b[1,out])."""
    params = []
    n_layers = len(shape) - 1
    keys = jax.random.split(key, n_layers)
    for li, (din, dout) in enumerate(zip(shape[:-1], shape[1:])):
        gain = gain_out if li == n_layers - 1 else 1.0
        w = orthogonal_(keys[li], dout, din, gain=gain, dtype=dtype)
        b = jnp.zeros((1, dout), dtype=dtype)  # nn.init.constant_(bias, 0)
        params.append((w, b))
    return params


# ----------------------------------------------------------------------------
# One-time host-side parameter prep (hoisted out of the per-call path).
# ----------------------------------------------------------------------------
def prepare_mlp_params(params, compute_dtype=jnp.bfloat16):
    """Pre-transpose weights to (in, out) and cast to the MXU input dtype.

    Call this ONCE and reuse the result; doing it per forward call adds an
    extra HBM pass over every weight that can cost more than the kernel.
    Returns (flat_params, dims) with flat_params = (W0.T, b0, W1.T, b1, ...).
    """
    dims = (params[0][0].shape[1],) + tuple(w.shape[0] for w, _ in params)
    flat = []
    for w, b in params:
        flat.append(jnp.asarray(w.T, dtype=compute_dtype))   # (in, out)
        flat.append(jnp.asarray(b, dtype=jnp.float32))        # (1, out), f32 add
    return tuple(flat), dims


# ----------------------------------------------------------------------------
# Pallas kernel: fused MLP forward (all Linear layers + activations).
# ----------------------------------------------------------------------------
def _mlp_kernel(*refs, n_layers, act, act_out):
    # refs = (x_ref, w0, b0, w1, b1, ..., w_{L-1}, b_{L-1}, out_ref)
    x_ref = refs[0]
    out_ref = refs[-1]
    param_refs = refs[1:-1]

    h = x_ref[...]
    for li in range(n_layers):
        w = param_refs[2 * li][...]           # (in, out), compute_dtype
        b = param_refs[2 * li + 1][...]       # (1, out), f32
        # Single cast of activations to the MXU input dtype; accumulation is
        # always f32 (preferred_element_type); bias add + activation stay f32.
        h = jnp.dot(h.astype(w.dtype), w,
                    preferred_element_type=jnp.float32) + b
        h = act(h) if li < n_layers - 1 else act_out(h)
    out_ref[...] = h.astype(out_ref.dtype)


def _choose_batch_tile(B, sub, d_in, d_out, dims, io_itemsize,
                       param_bytes, vmem_budget):
    """Pick TB: multiple of `sub`, <= 512, VMEM-gated, >= 2 tiles if possible."""
    if B <= sub:
        return sub
    # Bytes per batch row while resident: double-buffered x/out tiles plus
    # headroom for the f32 intermediate activations kept live in the kernel.
    row_bytes = 2 * (d_in + d_out) * io_itemsize + 4 * max(dims) * 4
    avail = vmem_budget - 2 * param_bytes
    if avail <= row_bytes * sub:
        tb_vmem = sub
    else:
        tb_vmem = (avail // row_bytes) // sub * sub
    tb = min(512, int(tb_vmem), _round_up(B, sub))
    # Keep >= 2 grid steps when B allows it: lets the "parallel" axis split
    # across both TensorCores on v7x and overlaps x/out DMA with compute.
    if B >= 2 * sub:
        tb = min(tb, _round_up((B + 1) // 2, sub))
    return max(sub, (tb // sub) * sub)


def mlp_forward(x, prepared, act=jnp.tanh, act_out=lambda v: v):
    """x: [B, d_in] -> [B, d_out]; `prepared` = prepare_mlp_params(params)."""
    flat_params, dims = prepared
    n_layers = len(flat_params) // 2
    B, d_in = x.shape
    assert d_in == dims[0], "input feature dim mismatch"
    d_out = dims[-1]

    io_itemsize = jnp.dtype(x.dtype).itemsize
    sub = _sublane_multiple(x.dtype)

    vmem_budget = int(0.85 * _vmem_capacity_bytes())
    param_bytes = sum(int(p.size) * p.dtype.itemsize for p in flat_params)

    TB = _choose_batch_tile(B, sub, d_in, d_out, dims, io_itemsize,
                            param_bytes, vmem_budget)
    B_pad = _round_up(B, TB)
    n_tiles = B_pad // TB

    # Only the batch dim is ever padded; feature dims keep their true sizes
    # (a block last-dim equal to the full array dim is always legal), so there
    # is no extra HBM pad/slice pass over x or the output feature axis.
    x_in = x if B_pad == B else jnp.pad(x, ((0, B_pad - B), (0, 0)))

    x_spec = pl.BlockSpec((TB, d_in), lambda i: (i, 0))
    out_spec = pl.BlockSpec((TB, d_out), lambda i: (i, 0))

    # Advisory cost estimate so XLA can overlap this small custom call.
    flops = 2 * B_pad * sum(dims[i] * dims[i + 1] for i in range(n_layers))
    transcendentals = B_pad * sum(dims[1:-1]) if n_layers > 1 else 0
    bytes_accessed = (B_pad * d_in * io_itemsize + param_bytes
                      + B_pad * d_out * io_itemsize)
    cost = pl.CostEstimate(flops=flops, transcendentals=transcendentals,
                           bytes_accessed=bytes_accessed)

    # VMEM limit: actual footprint with headroom, clamped to the HW budget.
    tile_bytes = TB * (d_in + d_out) * io_itemsize
    interm_bytes = 4 * TB * max(dims) * 4
    vmem_need = 2 * param_bytes + 2 * tile_bytes + interm_bytes
    vmem_limit = int(min(max(2 * vmem_need, 8 << 20), vmem_budget))

    kernel = functools.partial(_mlp_kernel, n_layers=n_layers,
                               act=act, act_out=act_out)

    def build(param_buffer_count):
        in_specs = [x_spec]
        for p in flat_params:
            if param_buffer_count == 1:
                # Constant block index across the grid -> single-buffer the
                # weights/biases so they aren't double-allocated in VMEM.
                spec = pl.BlockSpec(p.shape, lambda i: (0, 0),
                                    pipeline_mode=pl.Buffered(1))
            else:
                spec = pl.BlockSpec(p.shape, lambda i: (0, 0))
            in_specs.append(spec)
        return pl.pallas_call(
            kernel,
            out_shape=jax.ShapeDtypeStruct((B_pad, d_out), x.dtype),
            grid_spec=pltpu.PrefetchScalarGridSpec(
                num_scalar_prefetch=0,
                grid=(n_tiles,),
                in_specs=in_specs,
                out_specs=out_spec,
            ),
            compiler_params=pltpu.CompilerParams(
                dimension_semantics=("parallel",),  # 2-TC split on v7x
                vmem_limit_bytes=vmem_limit,
            ),
            cost_estimate=cost,
        )

    try:
        out_pad = build(1)(x_in, *flat_params)
    except Exception:
        # Fallback for JAX versions without pipeline_mode support on TPU.
        out_pad = build(2)(x_in, *flat_params)

    return out_pad if B_pad == B else out_pad[:B]


# ----------------------------------------------------------------------------
# Pure-JAX reference for sanity checking.
# ----------------------------------------------------------------------------
def mlp_reference(x, params, act=jnp.tanh, act_out=lambda v: v):
    h = x.astype(jnp.float32)
    for li, (w, b) in enumerate(params):
        h = h @ w.T.astype(jnp.float32) + b.astype(jnp.float32)
        h = act(h) if li < len(params) - 1 else act_out(h)
    return h.astype(x.dtype)


if __name__ == "__main__":
    # MLP(shape=(32, 64, 64, 16), act=nn.Tanh, act_out=nn.Identity, gain_out=1.0)
    shape = (32, 64, 64, 16)
    gain_out = 1.0
    batch = 8

    key = jax.random.PRNGKey(0)
    k_params, k_x = jax.random.split(key)

    params = init_mlp_params(k_params, shape, gain_out=gain_out)
    x = jax.random.normal(k_x, (batch, shape[0]), dtype=jnp.float32)

    ref = mlp_reference(x, params, act=jnp.tanh, act_out=lambda v: v)

    # f32 MXU inputs: strict tolerance.
    prep_f32 = prepare_mlp_params(params, compute_dtype=jnp.float32)
    out_f32 = jax.block_until_ready(
        mlp_forward(x, prep_f32, act=jnp.tanh, act_out=lambda v: v))
    assert out_f32.shape == (batch, shape[-1])
    assert jnp.allclose(out_f32, ref, atol=1e-5, rtol=1e-5), "f32 mismatch"

    # bf16 MXU inputs (recommended on v6e/v7x): looser tolerance, f32 accum.
    prep_bf16 = prepare_mlp_params(params, compute_dtype=jnp.bfloat16)
    out_bf16 = jax.block_until_ready(
        mlp_forward(x, prep_bf16, act=jnp.tanh, act_out=lambda v: v))
    assert out_bf16.shape == (batch, shape[-1])
    assert jnp.allclose(out_bf16, ref, atol=5e-2, rtol=5e-2), "bf16 mismatch"

    print("KERNEL_OK")
</pallas_src>

<mosaic_0001>
module attributes {stable_mosaic.version = 11 : i64} {
  func.func @_mlp_kernel(%arg0: i32, %arg1: memref<8x32xf32, #tpu.memory_space<vmem>>, %arg2: memref<32x64xf32, #tpu.memory_space<vmem>>, %arg3: memref<1x64xf32, #tpu.memory_space<vmem>>, %arg4: memref<64x64xf32, #tpu.memory_space<vmem>>, %arg5: memref<1x64xf32, #tpu.memory_space<vmem>>, %arg6: memref<64x16xf32, #tpu.memory_space<vmem>>, %arg7: memref<1x16xf32, #tpu.memory_space<vmem>>, %arg8: memref<8x16xf32, #tpu.memory_space<vmem>>) attributes {dimension_semantics = [#tpu.dimension_semantics<parallel>], iteration_bounds = array<i64: 1>, scalar_prefetch = 0 : i64, scratch_operands = 0 : i64, tpu.core_type = #tpu.core_type<tc>, window_params = [{transform_indices = @transform_0, window_bounds = array<i64: 8, 32>}, {pipeline_mode = #tpu.pipeline_mode<synchronous>, transform_indices = @transform_1, window_bounds = array<i64: 32, 64>}, {pipeline_mode = #tpu.pipeline_mode<synchronous>, transform_indices = @transform_2, window_bounds = array<i64: 1, 64>}, {pipeline_mode = #tpu.pipeline_mode<synchronous>, transform_indices = @transform_3, window_bounds = array<i64: 64, 64>}, {pipeline_mode = #tpu.pipeline_mode<synchronous>, transform_indices = @transform_4, window_bounds = array<i64: 1, 64>}, {pipeline_mode = #tpu.pipeline_mode<synchronous>, transform_indices = @transform_5, window_bounds = array<i64: 64, 16>}, {pipeline_mode = #tpu.pipeline_mode<synchronous>, transform_indices = @transform_6, window_bounds = array<i64: 1, 16>}, {transform_indices = @transform_7, window_bounds = array<i64: 8, 16>}]} {
    %c0 = arith.constant 0 : index
    %c0_0 = arith.constant 0 : index
    %0 = vector.load %arg1[%c0, %c0_0] : memref<8x32xf32, #tpu.memory_space<vmem>>, vector<8x32xf32>
    %c0_1 = arith.constant 0 : index
    %c0_2 = arith.constant 0 : index
    %1 = vector.load %arg2[%c0_1, %c0_2] : memref<32x64xf32, #tpu.memory_space<vmem>>, vector<32x64xf32>
    %c0_3 = arith.constant 0 : index
    %c0_4 = arith.constant 0 : index
    %2 = vector.load %arg3[%c0_3, %c0_4] : memref<1x64xf32, #tpu.memory_space<vmem>>, vector<1x64xf32>
    %cst = arith.constant dense<0.000000e+00> : vector<8x64xf32>
    %3 = tpu.matmul %0, %1, %cst {dimension_numbers = #tpu.dot_dimension_numbers<[1], [0], [0], [1], [0, 0, 1, 1], [], []>} : vector<8x32xf32>, vector<32x64xf32>, vector<8x64xf32> -> vector<8x64xf32>
    %4 = vector.broadcast %2 : vector<1x64xf32> to vector<8x64xf32>
    %5 = arith.addf %3, %4 : vector<8x64xf32>
    %6 = math.tanh %5 : vector<8x64xf32>
    %c0_5 = arith.constant 0 : index
    %c0_6 = arith.constant 0 : index
    %7 = vector.load %arg4[%c0_5, %c0_6] : memref<64x64xf32, #tpu.memory_space<vmem>>, vector<64x64xf32>
    %c0_7 = arith.constant 0 : index
    %c0_8 = arith.constant 0 : index
    %8 = vector.load %arg5[%c0_7, %c0_8] : memref<1x64xf32, #tpu.memory_space<vmem>>, vector<1x64xf32>
    %cst_9 = arith.constant dense<0.000000e+00> : vector<8x64xf32>
    %9 = tpu.matmul %6, %7, %cst_9 {dimension_numbers = #tpu.dot_dimension_numbers<[1], [0], [0], [1], [0, 0, 1, 1], [], []>} : vector<8x64xf32>, vector<64x64xf32>, vector<8x64xf32> -> vector<8x64xf32>
    %10 = vector.broadcast %8 : vector<1x64xf32> to vector<8x64xf32>
    %11 = arith.addf %9, %10 : vector<8x64xf32>
    %12 = math.tanh %11 : vector<8x64xf32>
    %c0_10 = arith.constant 0 : index
    %c0_11 = arith.constant 0 : index
    %13 = vector.load %arg6[%c0_10, %c0_11] : memref<64x16xf32, #tpu.memory_space<vmem>>, vector<64x16xf32>
    %c0_12 = arith.constant 0 : index
    %c0_13 = arith.constant 0 : index
    %14 = vector.load %arg7[%c0_12, %c0_13] : memref<1x16xf32, #tpu.memory_space<vmem>>, vector<1x16xf32>
    %cst_14 = arith.constant dense<0.000000e+00> : vector<8x16xf32>
    %15 = tpu.matmul %12, %13, %cst_14 {dimension_numbers = #tpu.dot_dimension_numbers<[1], [0], [0], [1], [0, 0, 1, 1], [], []>} : vector<8x64xf32>, vector<64x16xf32>, vector<8x16xf32> -> vector<8x16xf32>
    %16 = vector.broadcast %14 : vector<1x16xf32> to vector<8x16xf32>
    %17 = arith.addf %15, %16 : vector<8x16xf32>
    %c0_15 = arith.constant 0 : index
    %c0_16 = arith.constant 0 : index
    %18 = vector.load %arg8[%c0_15, %c0_16] : memref<8x16xf32, #tpu.memory_space<vmem>>, vector<8x16xf32>
    tpu.vector_store %arg8[%c0_15, %c0_16], %17 {strides = array<i32>} : memref<8x16xf32, #tpu.memory_space<vmem>>, vector<8x16xf32>,
    return
  }
  func.func @transform_0(%arg0: i32) -> (i32, i32) {
    %c0_i32 = arith.constant 0 : i32
    %c0_i32_0 = arith.constant 0 : i32
    return %arg0, %c0_i32 : i32, i32
  }
  func.func @transform_1(%arg0: i32) -> (i32, i32) {
    %c0_i32 = arith.constant 0 : i32
    %c0_i32_0 = arith.constant 0 : i32
    %c0_i32_1 = arith.constant 0 : i32
    return %c0_i32, %c0_i32_0 : i32, i32
  }
  func.func @transform_2(%arg0: i32) -> (i32, i32) {
    %c0_i32 = arith.constant 0 : i32
    %c0_i32_0 = arith.constant 0 : i32
    %c0_i32_1 = arith.constant 0 : i32
    return %c0_i32, %c0_i32_0 : i32, i32
  }
  func.func @transform_3(%arg0: i32) -> (i32, i32) {
    %c0_i32 = arith.constant 0 : i32
    %c0_i32_0 = arith.constant 0 : i32
    %c0_i32_1 = arith.constant 0 : i32
    return %c0_i32, %c0_i32_0 : i32, i32
  }
  func.func @transform_4(%arg0: i32) -> (i32, i32) {
    %c0_i32 = arith.constant 0 : i32
    %c0_i32_0 = arith.constant 0 : i32
    %c0_i32_1 = arith.constant 0 : i32
    return %c0_i32, %c0_i32_0 : i32, i32
  }
  func.func @transform_5(%arg0: i32) -> (i32, i32) {
    %c0_i32 = arith.constant 0 : i32
    %c0_i32_0 = arith.constant 0 : i32
    %c0_i32_1 = arith.constant 0 : i32
    return %c0_i32, %c0_i32_0 : i32, i32
  }
  func.func @transform_6(%arg0: i32) -> (i32, i32) {
    %c0_i32 = arith.constant 0 : i32
    %c0_i32_0 = arith.constant 0 : i32
    %c0_i32_1 = arith.constant 0 : i32
    return %c0_i32, %c0_i32_0 : i32, i32
  }
  func.func @transform_7(%arg0: i32) -> (i32, i32) {
    %c0_i32 = arith.constant 0 : i32
    %c0_i32_0 = arith.constant 0 : i32
    return %arg0, %c0_i32 : i32, i32
  }
}

module attributes {stable_mosaic.version = 11 : i64} {
  func.func @_mlp_kernel(%arg0: i32, %arg1: memref<8x32xf32, #tpu.memory_space<vmem>>, %arg2: memref<32x64xf32, #tpu.memory_space<vmem>>, %arg3: memref<1x64xf32, #tpu.memory_space<vmem>>, %arg4: memref<64x64xf32, #tpu.memory_space<vmem>>, %arg5: memref<1x64xf32, #tpu.memory_space<vmem>>, %arg6: memref<64x16xf32, #tpu.memory_space<vmem>>, %arg7: memref<1x16xf32, #tpu.memory_space<vmem>>, %arg8: memref<8x16xf32, #tpu.memory_space<vmem>>) attributes {dimension_semantics = [#tpu.dimension_semantics<parallel>], iteration_bounds = array<i64: 1>, scalar_prefetch = 0 : i64, scratch_operands = 0 : i64, tpu.core_type = #tpu.core_type<tc>, window_params = [{transform_indices = @transform_0, window_bounds = array<i64: 8, 32>}, {pipeline_mode = #tpu.pipeline_mode<synchronous>, transform_indices = @transform_1, window_bounds = array<i64: 32, 64>}, {pipeline_mode = #tpu.pipeline_mode<synchronous>, transform_indices = @transform_2, window_bounds = array<i64: 1, 64>}, {pipeline_mode = #tpu.pipeline_mode<synchronous>, transform_indices = @transform_3, window_bounds = array<i64: 64, 64>}, {pipeline_mode = #tpu.pipeline_mode<synchronous>, transform_indices = @transform_4, window_bounds = array<i64: 1, 64>}, {pipeline_mode = #tpu.pipeline_mode<synchronous>, transform_indices = @transform_5, window_bounds = array<i64: 64, 16>}, {pipeline_mode = #tpu.pipeline_mode<synchronous>, transform_indices = @transform_6, window_bounds = array<i64: 1, 16>}, {transform_indices = @transform_7, window_bounds = array<i64: 8, 16>}]} {
    %c0 = arith.constant 0 : index
    %c0_0 = arith.constant 0 : index
    %0 = vector.load %arg1[%c0, %c0_0] : memref<8x32xf32, #tpu.memory_space<vmem>>, vector<8x32xf32>
    %c0_1 = arith.constant 0 : index
    %c0_2 = arith.constant 0 : index
    %1 = vector.load %arg2[%c0_1, %c0_2] : memref<32x64xf32, #tpu.memory_space<vmem>>, vector<32x64xf32>
    %c0_3 = arith.constant 0 : index
    %c0_4 = arith.constant 0 : index
    %2 = vector.load %arg3[%c0_3, %c0_4] : memref<1x64xf32, #tpu.memory_space<vmem>>, vector<1x64xf32>
    %cst = arith.constant dense<0.000000e+00> : vector<8x64xf32>
    %3 = tpu.matmul %0, %1, %cst {dimension_numbers = #tpu.dot_dimension_numbers<[1], [0], [0], [1], [0, 0, 1, 1], [], []>} : vector<8x32xf32>, vector<32x64xf32>, vector<8x64xf32> -> vector<8x64xf32>
    %4 = vector.broadcast %2 : vector<1x64xf32> to vector<8x64xf32>
    %5 = arith.addf %3, %4 : vector<8x64xf32>
    %6 = math.tanh %5 : vector<8x64xf32>
    %c0_5 = arith.constant 0 : index
    %c0_6 = arith.constant 0 : index
    %7 = vector.load %arg4[%c0_5, %c0_6] : memref<64x64xf32, #tpu.memory_space<vmem>>, vector<64x64xf32>
    %c0_7 = arith.constant 0 : index
    %c0_8 = arith.constant 0 : index
    %8 = vector.load %arg5[%c0_7, %c0_8] : memref<1x64xf32, #tpu.memory_space<vmem>>, vector<1x64xf32>
    %cst_9 = arith.constant dense<0.000000e+00> : vector<8x64xf32>
    %9 = tpu.matmul %6, %7, %cst_9 {dimension_numbers = #tpu.dot_dimension_numbers<[1], [0], [0], [1], [0, 0, 1, 1], [], []>} : vector<8x64xf32>, vector<64x64xf32>, vector<8x64xf32> -> vector<8x64xf32>
    %10 = vector.broadcast %8 : vector<1x64xf32> to vector<8x64xf32>
    %11 = arith.addf %9, %10 : vector<8x64xf32>
    %12 = math.tanh %11 : vector<8x64xf32>
    %c0_10 = arith.constant 0 : index
    %c0_11 = arith.constant 0 : index
    %13 = vector.load %arg6[%c0_10, %c0_11] : memref<64x16xf32, #tpu.memory_space<vmem>>, vector<64x16xf32>
    %c0_12 = arith.constant 0 : index
    %c0_13 = arith.constant 0 : index
    %14 = vector.load %arg7[%c0_12, %c0_13] : memref<1x16xf32, #tpu.memory_space<vmem>>, vector<1x16xf32>
    %cst_14 = arith.constant dense<0.000000e+00> : vector<8x16xf32>
    %15 = tpu.matmul %12, %13, %cst_14 {dimension_numbers = #tpu.dot_dimension_numbers<[1], [0], [0], [1], [0, 0, 1, 1], [], []>} : vector<8x64xf32>, vector<64x16xf32>, vector<8x16xf32> -> vector<8x16xf32>
    %16 = vector.broadcast %14 : vector<1x16xf32> to vector<8x16xf32>
    %17 = arith.addf %15, %16 : vector<8x16xf32>
    %c0_15 = arith.constant 0 : index
    %c0_16 = arith.constant 0 : index
    %18 = vector.load %arg8[%c0_15, %c0_16] : memref<8x16xf32, #tpu.memory_space<vmem>>, vector<8x16xf32>
    tpu.vector_store %arg8[%c0_15, %c0_16], %17 {strides = array<i32>} : memref<8x16xf32, #tpu.memory_space<vmem>>, vector<8x16xf32>,
    return
  }
  func.func @transform_0(%arg0: i32) -> (i32, i32) {
    %c0_i32 = arith.constant 0 : i32
    %c0_i32_0 = arith.constant 0 : i32
    return %arg0, %c0_i32 : i32, i32
  }
  func.func @transform_1(%arg0: i32) -> (i32, i32) {
    %c0_i32 = arith.constant 0 : i32
    %c0_i32_0 = arith.constant 0 : i32
    %c0_i32_1 = arith.constant 0 : i32
    return %c0_i32, %c0_i32_0 : i32, i32
  }
  func.func @transform_2(%arg0: i32) -> (i32, i32) {
    %c0_i32 = arith.constant 0 : i32
    %c0_i32_0 = arith.constant 0 : i32
    %c0_i32_1 = arith.constant 0 : i32
    return %c0_i32, %c0_i32_0 : i32, i32
  }
  func.func @transform_3(%arg0: i32) -> (i32, i32) {
    %c0_i32 = arith.constant 0 : i32
    %c0_i32_0 = arith.constant 0 : i32
    %c0_i32_1 = arith.constant 0 : i32
    return %c0_i32, %c0_i32_0 : i32, i32
  }
  func.func @transform_4(%arg0: i32) -> (i32, i32) {
    %c0_i32 = arith.constant 0 : i32
    %c0_i32_0 = arith.constant 0 : i32
    %c0_i32_1 = arith.constant 0 : i32
    return %c0_i32, %c0_i32_0 : i32, i32
  }
  func.func @transform_5(%arg0: i32) -> (i32, i32) {
    %c0_i32 = arith.constant 0 : i32
    %c0_i32_0 = arith.constant 0 : i32
    %c0_i32_1 = arith.constant 0 : i32
    return %c0_i32, %c0_i32_0 : i32, i32
  }
  func.func @transform_6(%arg0: i32) -> (i32, i32) {
    %c0_i32 = arith.constant 0 : i32
    %c0_i32_0 = arith.constant 0 : i32
    %c0_i32_1 = arith.constant 0 : i32
    return %c0_i32, %c0_i32_0 : i32, i32
  }
  func.func @transform_7(%arg0: i32) -> (i32, i32) {
    %c0_i32 = arith.constant 0 : i32
    %c0_i32_0 = arith.constant 0 : i32
    return %arg0, %c0_i32 : i32, i32
  }
}

</mosaic_0001>

<llo_original>
// kernel: tpu_custom_call.1
$region0: #{tpu_custom_call.1}
  #allocation0 [shape = 'u32[]', space=smem, size = 0x4, offset = 0x4, fixed_abs, tag = 'smem constant byte address 0x4 - core index']
  #allocation1 [shape = 'u32[144,128]{1,0:T(1,128)}', space=vmem, size = 0x12000, scoped, tag = 'internal scratch']
  %s0 = inlined_call_operand.vmem [shape: f32[8,32], index: 0, kind: input, shape index: {}]
  %s1 = inlined_call_operand.hbm [shape: f32[32,64], index: 1, kind: input, shape index: {}]
  %s2 = inlined_call_operand.vmem [shape: f32[1,64], index: 2, kind: input, shape index: {}]
  %s3 = inlined_call_operand.vmem [shape: f32[64,64], index: 3, kind: input, shape index: {}]
  %s4 = inlined_call_operand.vmem [shape: f32[1,64], index: 4, kind: input, shape index: {}]
  %s5 = inlined_call_operand.vmem [shape: f32[64,16], index: 5, kind: input, shape index: {}]
  %s6 = inlined_call_operand.vmem [shape: f32[1,16], index: 6, kind: input, shape index: {}]
  %s7 = inlined_call_operand.hbm [shape: f32[8,16], index: 7, kind: output, shape index: {}]
  %s8 = sld [smem:[#allocation0]]
  $region42: #{tpu_custom_call.1} parent=0
    _
  %s10 = ssub.s32 1, %s8
  %s11 = scalar_select 0, %s10, %s8
  $region1: #{tpu_custom_call.1} parent=0
    #allocation2 [shape = 'u8[16384]{0}', space=vmem, size = 0x4000, scoped, tag = 'input window, operand 1, single buffered']
    #allocation3 [shape = 's32[1]{0}', space=sflag, size = 0x4, scoped, tag = 'scoped memory for tpu_custom_call.1']
    #allocation4 [shape = 's32[1]{0}', space=sflag, size = 0x4, scoped, tag = 'scoped memory for tpu_custom_call.1']
    #allocation5 [shape = 'u8[4096]{0}', space=vmem, size = 0x1000, scoped, tag = 'output window, operand 0, single buffered']
    %12 = vsyncpa [#allocation3], 0
    %13 = vsyncpa [#allocation4], 0
    // Predicated region
    $region2: #{tpu_custom_call.1} parent=1 // pred_check
      _
    $region3: #{tpu_custom_call.1} parent=1 // pred_check_branch
      %15 = sbr.rel (0) target = $region5
    $region4: #{tpu_custom_call.1} parent=1 // pred_region
      _
    $region5: #{tpu_custom_call.1} parent=1 // pred_fallthru
      _
    // Predicated region
    $region6: #{tpu_custom_call.1} parent=1 // pred_check
      _
    $region7: #{tpu_custom_call.1} parent=1 // pred_check_branch
      %17 = sbr.rel (0) target = $region9
    $region8: #{tpu_custom_call.1} parent=1 // pred_region
      %s19 = ssub.s32 512, 512
      %20 = vsyncadd [#allocation3], %s19
      %s21 = sshll.u32 [#allocation2], 4
      %s22 = int_to_ptr.vmem [resolvable:$true] %s21
      %27 = dma.hbm_to_vmem [thread:$0]  %s1, 512, %s22, [#allocation3], 128, 128, 8
    $region9: #{tpu_custom_call.1} parent=1 // pred_fallthru
      _
    // Predicated region
    $region10: #{tpu_custom_call.1} parent=1 // pred_check
      _
    $region11: #{tpu_custom_call.1} parent=1 // pred_check_branch
      %29 = sbr.rel (0) target = $region13
    $region12: #{tpu_custom_call.1} parent=1 // pred_region
      _
    $region13: #{tpu_custom_call.1} parent=1 // pred_fallthru
      _
    // Predicated region
    $region14: #{tpu_custom_call.1} parent=1 // pred_check
      _
    $region15: #{tpu_custom_call.1} parent=1 // pred_check_branch
      %31 = sbr.rel (0) target = $region17
    $region16: #{tpu_custom_call.1} parent=1 // pred_region
      _
    $region17: #{tpu_custom_call.1} parent=1 // pred_fallthru
      _
    // Predicated region
    $region18: #{tpu_custom_call.1} parent=1 // pred_check
      _
    $region19: #{tpu_custom_call.1} parent=1 // pred_check_branch
      %33 = sbr.rel (0) target = $region21
    $region20: #{tpu_custom_call.1} parent=1 // pred_region
      _
    $region21: #{tpu_custom_call.1} parent=1 // pred_fallthru
      _
    // Predicated region
    $region22: #{tpu_custom_call.1} parent=1 // pred_check
      _
    $region23: #{tpu_custom_call.1} parent=1 // pred_check_branch
      %35 = sbr.rel (0) target = $region25
    $region24: #{tpu_custom_call.1} parent=1 // pred_region
      _
    $region25: #{tpu_custom_call.1} parent=1 // pred_fallthru
      _
    // Predicated region
    $region26: #{tpu_custom_call.1} parent=1 // pred_check
      _
    $region27: #{tpu_custom_call.1} parent=1 // pred_check_branch
      %37 = sbr.rel (0) target = $region29
    $region28: #{tpu_custom_call.1} parent=1 // pred_region
      _
    $region29: #{tpu_custom_call.1} parent=1 // pred_fallthru
      _
    // Predicated region
    $region30: #{tpu_custom_call.1} parent=1 // pred_check
      _
    $region31: #{tpu_custom_call.1} parent=1 // pred_check_branch
      %39 = sbr.rel (0) target = $region33
    $region32: #{tpu_custom_call.1} parent=1 // pred_region
      %40 = dma.done [#allocation3], 512
    $region33: #{tpu_custom_call.1} parent=1 // pred_fallthru
      _
    %v41 = vld [vmem:[%s0] sm:$0xff]
    %v42 = vld [vmem:[#allocation2] sm:$0xff]
    %v43 = vld [vmem:[#allocation2 + $0x8] sm:$0xff]
    %v44 = vld [vmem:[#allocation2 + $0x10] sm:$0xff]
    %v45 = vld [vmem:[#allocation2 + $0x18] sm:$0xff]
    %v46 = vld [vmem:[%s2] sm:$0x1]
    %v48 = vlaneseq
    %v49 = vshrl.u32 %v48, 7
    %v50 = vsub.s32 0, %v49
    %v51 = vrot.slane %v46, %v50
    %vm53 = vcmask 261120
    %v55 = vsel %vm53, %v41, 0
    %57 = vmatprep.subr.mxu0 0.0
    %58 = vmatpush1.msra.mxu0 %v42
    %59 = vmatprep.subr.mxu0 0.0
    %60 = vmatpush1.msra.mxu0 %v43
    %61 = vmatprep.subr.mxu0 0.0
    %62 = vmatpush1.msra.mxu0 %v44
    %63 = vmatprep.subr.mxu0 0.0
    %64 = vmatpush1.msra.mxu0 %v45
    %65 = vmatprep.subr.mxu0 0.0
    %66 = vmatpush1.msra.mxu0 0.0
    %67 = vmatprep.subr.mxu0 0.0
    %68 = vmatpush1.msra.mxu0 0.0
    %69 = vmatprep.subr.mxu0 0.0
    %70 = vmatpush1.msra.mxu0 0.0
    %71 = vmatprep.subr.mxu0 0.0
    %72 = vmatpush1.msra.mxu0 0.0
    %73 = vmatprep.subr.mxu0 0.0
    %74 = vmatpush1.msra.mxu0 0.0
    %75 = vmatprep.subr.mxu0 0.0
    %76 = vmatpush1.msra.mxu0 0.0
    %77 = vmatprep.subr.mxu0 0.0
    %78 = vmatpush1.msra.mxu0 0.0
    %79 = vmatprep.subr.mxu0 0.0
    %80 = vmatpush1.msra.mxu0 0.0
    %81 = vmatprep.subr.mxu0 0.0
    %82 = vmatpush1.msra.mxu0 0.0
    %83 = vmatprep.subr.mxu0 0.0
    %84 = vmatpush1.msra.mxu0 0.0
    %85 = vmatprep.subr.mxu0 0.0
    %86 = vmatpush1.msra.mxu0 0.0
    %87 = vmatprep.subr.mxu0 0.0
    %88 = vmatpush1.msra.mxu0 0.0
    %89 = vmatprep.subr.mxu0 0.0
    %90 = vmatpush1.msra.mxu0 0.0
    %91 = vmatprep.subr.mxu0 0.0
    %92 = vmatpush1.msra.mxu0 0.0
    %93 = vmatprep.subr.mxu0 0.0
    %94 = vmatpush1.msra.mxu0 0.0
    %95 = vmatprep.subr.mxu0 0.0
    %96 = vmatpush1.msra.mxu0 0.0
    %97 = vmatprep.subr.mxu0 0.0
    %98 = vmatpush1.msra.mxu0 0.0
    %99 = vmatprep.subr.mxu0 0.0
    %100 = vmatpush1.msra.mxu0 0.0
    %101 = vmatprep.subr.mxu0 0.0
    %102 = vmatpush1.msra.mxu0 0.0
    %103 = vmatprep.subr.mxu0 0.0
    %104 = vmatpush1.msra.mxu0 0.0
    %105 = vmatprep.subr.mxu0 0.0
    %106 = vmatpush1.msra.mxu0 0.0
    %107 = vmatprep.subr.mxu0 0.0
    %108 = vmatpush1.msra.mxu0 0.0
    %109 = vmatprep.subr.mxu0 0.0
    %110 = vmatpush1.msra.mxu0 0.0
    %111 = vmatprep.subr.mxu0 0.0
    %112 = vmatpush1.msra.mxu0 0.0
    %113 = vmatprep.subr.mxu0 0.0
    %114 = vmatpush1.msra.mxu0 0.0
    %115 = vmatprep.subr.mxu0 0.0
    %116 = vmatpush1.msra.mxu0 0.0
    %117 = vmatprep.subr.mxu0 0.0
    %118 = vmatpush1.msra.mxu0 0.0
    %119 = vmatprep.subr.mxu0 0.0
    %120 = vmatpush1.msra.mxu0 0.0
    %121 = vmatprep.mubr.f32.mxu0 0.0
    %122 = vmatmul.mubr.f32.gmra.mrb[0].mxu0 %v55
    %v123 = vpop.f32.mrb[0].mxu0
    %v124 = vadd.f32 %v51, %v123
    %v125 = vpop.f32.mrb[0].mxu0
    %126 = vdwg.mxu0
    %v127 = vtanh.pop %v124
    %v128 = vld [vmem:[%s3] sm:$0xff]
    %v129 = vld [vmem:[%s3 + $0x8] sm:$0xff]
    %v130 = vld [vmem:[%s3 + $0x10] sm:$0xff]
    %v131 = vld [vmem:[%s3 + $0x18] sm:$0xff]
    %v132 = vld [vmem:[%s3 + $0x20] sm:$0xff]
    %v133 = vld [vmem:[%s3 + $0x28] sm:$0xff]
    %v134 = vld [vmem:[%s3 + $0x30] sm:$0xff]
    %v135 = vld [vmem:[%s3 + $0x38] sm:$0xff]
    %v136 = vld [vmem:[%s4] sm:$0x1]
    %v138 = vlaneseq
    %v139 = vshrl.u32 %v138, 7
    %v140 = vsub.s32 0, %v139
    %v141 = vrot.slane %v136, %v140
    %vm143 = vcmask 523264
    %v145 = vsel %vm143, %v127, 0
    %147 = vmatprep.subr.mxu0 0.0
    %148 = vmatpush1.msra.mxu0 %v128
    %149 = vmatprep.subr.mxu0 0.0
    %150 = vmatpush1.msra.mxu0 %v129
    %151 = vmatprep.subr.mxu0 0.0
    %152 = vmatpush1.msra.mxu0 %v130
    %153 = vmatprep.subr.mxu0 0.0
    %154 = vmatpush1.msra.mxu0 %v131
    %155 = vmatprep.subr.mxu0 0.0
    %156 = vmatpush1.msra.mxu0 %v132
    %157 = vmatprep.subr.mxu0 0.0
    %158 = vmatpush1.msra.mxu0 %v133
    %159 = vmatprep.subr.mxu0 0.0
    %160 = vmatpush1.msra.mxu0 %v134
    %161 = vmatprep.subr.mxu0 0.0
    %162 = vmatpush1.msra.mxu0 %v135
    %163 = vmatprep.subr.mxu0 0.0
    %164 = vmatpush1.msra.mxu0 0.0
    %165 = vmatprep.subr.mxu0 0.0
    %166 = vmatpush1.msra.mxu0 0.0
    %167 = vmatprep.subr.mxu0 0.0
    %168 = vmatpush1.msra.mxu0 0.0
    %169 = vmatprep.subr.mxu0 0.0
    %170 = vmatpush1.msra.mxu0 0.0
    %171 = vmatprep.subr.mxu0 0.0
    %172 = vmatpush1.msra.mxu0 0.0
    %173 = vmatprep.subr.mxu0 0.0
    %174 = vmatpush1.msra.mxu0 0.0
    %175 = vmatprep.subr.mxu0 0.0
    %176 = vmatpush1.msra.mxu0 0.0
    %177 = vmatprep.subr.mxu0 0.0
    %178 = vmatpush1.msra.mxu0 0.0
    %179 = vmatprep.subr.mxu0 0.0
    %180 = vmatpush1.msra.mxu0 0.0
    %181 = vmatprep.subr.mxu0 0.0
    %182 = vmatpush1.msra.mxu0 0.0
    %183 = vmatprep.subr.mxu0 0.0
    %184 = vmatpush1.msra.mxu0 0.0
    %185 = vmatprep.subr.mxu0 0.0
    %186 = vmatpush1.msra.mxu0 0.0
    %187 = vmatprep.subr.mxu0 0.0
    %188 = vmatpush1.msra.mxu0 0.0
    %189 = vmatprep.subr.mxu0 0.0
    %190 = vmatpush1.msra.mxu0 0.0
    %191 = vmatprep.subr.mxu0 0.0
    %192 = vmatpush1.msra.mxu0 0.0
    %193 = vmatprep.subr.mxu0 0.0
    %194 = vmatpush1.msra.mxu0 0.0
    %195 = vmatprep.subr.mxu0 0.0
    %196 = vmatpush1.msra.mxu0 0.0
    %197 = vmatprep.subr.mxu0 0.0
    %198 = vmatpush1.msra.mxu0 0.0
    %199 = vmatprep.subr.mxu0 0.0
    %200 = vmatpush1.msra.mxu0 0.0
    %201 = vmatprep.subr.mxu0 0.0
    %202 = vmatpush1.msra.mxu0 0.0
    %203 = vmatprep.subr.mxu0 0.0
    %204 = vmatpush1.msra.mxu0 0.0
    %205 = vmatprep.subr.mxu0 0.0
    %206 = vmatpush1.msra.mxu0 0.0
    %207 = vmatprep.subr.mxu0 0.0
    %208 = vmatpush1.msra.mxu0 0.0
    %209 = vmatprep.subr.mxu0 0.0
    %210 = vmatpush1.msra.mxu0 0.0
    %211 = vmatprep.mubr.f32.mxu0 0.0
    %212 = vmatmul.mubr.f32.gmra.mrb[0].mxu0 %v145
    %v213 = vpop.f32.mrb[0].mxu0
    %v214 = vadd.f32 %v141, %v213
    %v215 = vpop.f32.mrb[0].mxu0
    %216 = vdwg.mxu0
    %v217 = vtanh.pop %v214
    %v218 = vld [vmem:[%s5] sm:$0xff]
    %v219 = vld [vmem:[%s5 + $0x8] sm:$0xff]
    %v220 = vld [vmem:[%s5 + $0x10] sm:$0xff]
    %v221 = vld [vmem:[%s5 + $0x18] sm:$0xff]
    %v222 = vld [vmem:[%s5 + $0x20] sm:$0xff]
    %v223 = vld [vmem:[%s5 + $0x28] sm:$0xff]
    %v224 = vld [vmem:[%s5 + $0x30] sm:$0xff]
    %v225 = vld [vmem:[%s5 + $0x38] sm:$0xff]
    %v226 = vld [vmem:[%s6] sm:$0x1]
    %v228 = vlaneseq
    %v229 = vshrl.u32 %v228, 7
    %v230 = vsub.s32 0, %v229
    %v231 = vrot.slane %v226, %v230
    %v234 = vsel %vm143, %v217, 0
    %236 = vmatprep.subr.mxu0 0.0
    %237 = vmatpush1.msra.mxu0 %v218
    %238 = vmatprep.subr.mxu0 0.0
    %239 = vmatpush1.msra.mxu0 %v219
    %240 = vmatprep.subr.mxu0 0.0
    %241 = vmatpush1.msra.mxu0 %v220
    %242 = vmatprep.subr.mxu0 0.0
    %243 = vmatpush1.msra.mxu0 %v221
    %244 = vmatprep.subr.mxu0 0.0
    %245 = vmatpush1.msra.mxu0 %v222
    %246 = vmatprep.subr.mxu0 0.0
    %247 = vmatpush1.msra.mxu0 %v223
    %248 = vmatprep.subr.mxu0 0.0
    %249 = vmatpush1.msra.mxu0 %v224
    %250 = vmatprep.subr.mxu0 0.0
    %251 = vmatpush1.msra.mxu0 %v225
    %252 = vmatprep.subr.mxu0 0.0
    %253 = vmatpush1.msra.mxu0 0.0
    %254 = vmatprep.subr.mxu0 0.0
    %255 = vmatpush1.msra.mxu0 0.0
    %256 = vmatprep.subr.mxu0 0.0
    %257 = vmatpush1.msra.mxu0 0.0
    %258 = vmatprep.subr.mxu0 0.0
    %259 = vmatpush1.msra.mxu0 0.0
    %260 = vmatprep.subr.mxu0 0.0
    %261 = vmatpush1.msra.mxu0 0.0
    %262 = vmatprep.subr.mxu0 0.0
    %263 = vmatpush1.msra.mxu0 0.0
    %264 = vmatprep.subr.mxu0 0.0
    %265 = vmatpush1.msra.mxu0 0.0
    %266 = vmatprep.subr.mxu0 0.0
    %267 = vmatpush1.msra.mxu0 0.0
    %268 = vmatprep.subr.mxu0 0.0
    %269 = vmatpush1.msra.mxu0 0.0
    %270 = vmatprep.subr.mxu0 0.0
    %271 = vmatpush1.msra.mxu0 0.0
    %272 = vmatprep.subr.mxu0 0.0
    %273 = vmatpush1.msra.mxu0 0.0
    %274 = vmatprep.subr.mxu0 0.0
    %275 = vmatpush1.msra.mxu0 0.0
    %276 = vmatprep.subr.mxu0 0.0
    %277 = vmatpush1.msra.mxu0 0.0
    %278 = vmatprep.subr.mxu0 0.0
    %279 = vmatpush1.msra.mxu0 0.0
    %280 = vmatprep.subr.mxu0 0.0
    %281 = vmatpush1.msra.mxu0 0.0
    %282 = vmatprep.subr.mxu0 0.0
    %283 = vmatpush1.msra.mxu0 0.0
    %284 = vmatprep.subr.mxu0 0.0
    %285 = vmatpush1.msra.mxu0 0.0
    %286 = vmatprep.subr.mxu0 0.0
    %287 = vmatpush1.msra.mxu0 0.0
    %288 = vmatprep.subr.mxu0 0.0
    %289 = vmatpush1.msra.mxu0 0.0
    %290 = vmatprep.subr.mxu0 0.0
    %291 = vmatpush1.msra.mxu0 0.0
    %292 = vmatprep.subr.mxu0 0.0
    %293 = vmatpush1.msra.mxu0 0.0
    %294 = vmatprep.subr.mxu0 0.0
    %295 = vmatpush1.msra.mxu0 0.0
    %296 = vmatprep.subr.mxu0 0.0
    %297 = vmatpush1.msra.mxu0 0.0
    %298 = vmatprep.subr.mxu0 0.0
    %299 = vmatpush1.msra.mxu0 0.0
    %300 = vmatprep.mubr.f32.mxu0 0.0
    %301 = vmatmul.mubr.f32.gmra.mrb[0].mxu0 %v234
    %v302 = vpop.f32.mrb[0].mxu0
    %v303 = vadd.f32 %v231, %v302
    %v304 = vpop.f32.mrb[0].mxu0
    %305 = vdwg.mxu0
    %vm306 = vcmask 130048
    %307 = vst.msk [vmem:[#allocation5] sm:$0xff] %vm306, %v303
    // Predicated region
    $region34: #{tpu_custom_call.1} parent=1 // pred_check
      _
    $region35: #{tpu_custom_call.1} parent=1 // pred_check_branch
      %309 = sbr.rel (0) target = $region37
    $region36: #{tpu_custom_call.1} parent=1 // pred_region
      %s311 = ssub.s32 128, 128
      %312 = vsyncadd [#allocation4], %s311
      %s314 = sshll.u32 [#allocation5], 4
      %s315 = int_to_ptr.vmem [resolvable:$true] %s314
      %317 = dma.vmem_to_hbm [thread:$0]  %s315, 128, %s7, [#allocation4]
    $region37: #{tpu_custom_call.1} parent=1 // pred_fallthru
      _
    // Predicated region
    $region38: #{tpu_custom_call.1} parent=1 // pred_check
      _
    $region39: #{tpu_custom_call.1} parent=1 // pred_check_branch
      %319 = sbr.rel (0) target = $region41
    $region40: #{tpu_custom_call.1} parent=1 // pred_region
      %320 = dma.done [#allocation4], 128
    $region41: #{tpu_custom_call.1} parent=1 // pred_fallthru
      _
    %321 = vsyncpa [#allocation3], 1
    %322 = vsyncpa [#allocation4], 1

// kernel: tpu_custom_call.1
$region0: #{tpu_custom_call.1}
  #allocation0 [shape = 'u32[]', space=smem, size = 0x4, offset = 0x4, fixed_abs, tag = 'smem constant byte address 0x4 - core index']
  #allocation1 [shape = 'u32[144,128]{1,0:T(1,128)}', space=vmem, size = 0x12000, scoped, tag = 'internal scratch']
  %s0 = inlined_call_operand.vmem [shape: f32[8,32], index: 0, kind: input, shape index: {}]
  %s1 = inlined_call_operand.hbm [shape: f32[32,64], index: 1, kind: input, shape index: {}]
  %s2 = inlined_call_operand.vmem [shape: f32[1,64], index: 2, kind: input, shape index: {}]
  %s3 = inlined_call_operand.vmem [shape: f32[64,64], index: 3, kind: input, shape index: {}]
  %s4 = inlined_call_operand.vmem [shape: f32[1,64], index: 4, kind: input, shape index: {}]
  %s5 = inlined_call_operand.vmem [shape: f32[64,16], index: 5, kind: input, shape index: {}]
  %s6 = inlined_call_operand.vmem [shape: f32[1,16], index: 6, kind: input, shape index: {}]
  %s7 = inlined_call_operand.hbm [shape: f32[8,16], index: 7, kind: output, shape index: {}]
  %s8 = sld [smem:[#allocation0]]
  $region42: #{tpu_custom_call.1} parent=0
    _
  %s10 = ssub.s32 1, %s8
  %s11 = scalar_select 0, %s10, %s8
  $region1: #{tpu_custom_call.1} parent=0
    #allocation2 [shape = 'u8[16384]{0}', space=vmem, size = 0x4000, scoped, tag = 'input window, operand 1, single buffered']
    #allocation3 [shape = 's32[1]{0}', space=sflag, size = 0x4, scoped, tag = 'scoped memory for tpu_custom_call.1']
    #allocation4 [shape = 's32[1]{0}', space=sflag, size = 0x4, scoped, tag = 'scoped memory for tpu_custom_call.1']
    #allocation5 [shape = 'u8[4096]{0}', space=vmem, size = 0x1000, scoped, tag = 'output window, operand 0, single buffered']
    %12 = vsyncpa [#allocation3], 0
    %13 = vsyncpa [#allocation4], 0
    // Predicated region
    $region2: #{tpu_custom_call.1} parent=1 // pred_check
      _
    $region3: #{tpu_custom_call.1} parent=1 // pred_check_branch
      %15 = sbr.rel (0) target = $region5
    $region4: #{tpu_custom_call.1} parent=1 // pred_region
      _
    $region5: #{tpu_custom_call.1} parent=1 // pred_fallthru
      _
    // Predicated region
    $region6: #{tpu_custom_call.1} parent=1 // pred_check
      _
    $region7: #{tpu_custom_call.1} parent=1 // pred_check_branch
      %17 = sbr.rel (0) target = $region9
    $region8: #{tpu_custom_call.1} parent=1 // pred_region
      %s19 = ssub.s32 512, 512
      %20 = vsyncadd [#allocation3], %s19
      %s21 = sshll.u32 [#allocation2], 4
      %s22 = int_to_ptr.vmem [resolvable:$true] %s21
      %27 = dma.hbm_to_vmem [thread:$0]  %s1, 512, %s22, [#allocation3], 128, 128, 8
    $region9: #{tpu_custom_call.1} parent=1 // pred_fallthru
      _
    // Predicated region
    $region10: #{tpu_custom_call.1} parent=1 // pred_check
      _
    $region11: #{tpu_custom_call.1} parent=1 // pred_check_branch
      %29 = sbr.rel (0) target = $region13
    $region12: #{tpu_custom_call.1} parent=1 // pred_region
      _
    $region13: #{tpu_custom_call.1} parent=1 // pred_fallthru
      _
    // Predicated region
    $region14: #{tpu_custom_call.1} parent=1 // pred_check
      _
    $region15: #{tpu_custom_call.1} parent=1 // pred_check_branch
      %31 = sbr.rel (0) target = $region17
    $region16: #{tpu_custom_call.1} parent=1 // pred_region
      _
    $region17: #{tpu_custom_call.1} parent=1 // pred_fallthru
      _
    // Predicated region
    $region18: #{tpu_custom_call.1} parent=1 // pred_check
      _
    $region19: #{tpu_custom_call.1} parent=1 // pred_check_branch
      %33 = sbr.rel (0) target = $region21
    $region20: #{tpu_custom_call.1} parent=1 // pred_region
      _
    $region21: #{tpu_custom_call.1} parent=1 // pred_fallthru
      _
    // Predicated region
    $region22: #{tpu_custom_call.1} parent=1 // pred_check
      _
    $region23: #{tpu_custom_call.1} parent=1 // pred_check_branch
      %35 = sbr.rel (0) target = $region25
    $region24: #{tpu_custom_call.1} parent=1 // pred_region
      _
    $region25: #{tpu_custom_call.1} parent=1 // pred_fallthru
      _
    // Predicated region
    $region26: #{tpu_custom_call.1} parent=1 // pred_check
      _
    $region27: #{tpu_custom_call.1} parent=1 // pred_check_branch
      %37 = sbr.rel (0) target = $region29
    $region28: #{tpu_custom_call.1} parent=1 // pred_region
      _
    $region29: #{tpu_custom_call.1} parent=1 // pred_fallthru
      _
    // Predicated region
    $region30: #{tpu_custom_call.1} parent=1 // pred_check
      _
    $region31: #{tpu_custom_call.1} parent=1 // pred_check_branch
      %39 = sbr.rel (0) target = $region33
    $region32: #{tpu_custom_call.1} parent=1 // pred_region
      %40 = dma.done [#allocation3], 512
    $region33: #{tpu_custom_call.1} parent=1 // pred_fallthru
      _
    %v41 = vld [vmem:[%s0] sm:$0xff]
    %v42 = vld [vmem:[#allocation2] sm:$0xff]
    %v43 = vld [vmem:[#allocation2 + $0x8] sm:$0xff]
    %v44 = vld [vmem:[#allocation2 + $0x10] sm:$0xff]
    %v45 = vld [vmem:[#allocation2 + $0x18] sm:$0xff]
    %v46 = vld [vmem:[%s2] sm:$0x1]
    %v48 = vlaneseq
    %v49 = vshrl.u32 %v48, 7
    %v50 = vsub.s32 0, %v49
    %v51 = vrot.slane %v46, %v50
    %vm53 = vcmask 261120
    %v55 = vsel %vm53, %v41, 0
    %57 = vmatprep.subr.mxu0 0.0
    %58 = vmatpush1.msra.mxu0 %v42
    %59 = vmatprep.subr.mxu0 0.0
    %60 = vmatpush1.msra.mxu0 %v43
    %61 = vmatprep.subr.mxu0 0.0
    %62 = vmatpush1.msra.mxu0 %v44
    %63 = vmatprep.subr.mxu0 0.0
    %64 = vmatpush1.msra.mxu0 %v45
    %65 = vmatprep.subr.mxu0 0.0
    %66 = vmatpush1.msra.mxu0 0.0
    %67 = vmatprep.subr.mxu0 0.0
    %68 = vmatpush1.msra.mxu0 0.0
    %69 = vmatprep.subr.mxu0 0.0
    %70 = vmatpush1.msra.mxu0 0.0
    %71 = vmatprep.subr.mxu0 0.0
    %72 = vmatpush1.msra.mxu0 0.0
    %73 = vmatprep.subr.mxu0 0.0
    %74 = vmatpush1.msra.mxu0 0.0
    %75 = vmatprep.subr.mxu0 0.0
    %76 = vmatpush1.msra.mxu0 0.0
    %77 = vmatprep.subr.mxu0 0.0
    %78 = vmatpush1.msra.mxu0 0.0
    %79 = vmatprep.subr.mxu0 0.0
    %80 = vmatpush1.msra.mxu0 0.0
    %81 = vmatprep.subr.mxu0 0.0
    %82 = vmatpush1.msra.mxu0 0.0
    %83 = vmatprep.subr.mxu0 0.0
    %84 = vmatpush1.msra.mxu0 0.0
    %85 = vmatprep.subr.mxu0 0.0
    %86 = vmatpush1.msra.mxu0 0.0
    %87 = vmatprep.subr.mxu0 0.0
    %88 = vmatpush1.msra.mxu0 0.0
    %89 = vmatprep.subr.mxu0 0.0
    %90 = vmatpush1.msra.mxu0 0.0
    %91 = vmatprep.subr.mxu0 0.0
    %92 = vmatpush1.msra.mxu0 0.0
    %93 = vmatprep.subr.mxu0 0.0
    %94 = vmatpush1.msra.mxu0 0.0
    %95 = vmatprep.subr.mxu0 0.0
    %96 = vmatpush1.msra.mxu0 0.0
    %97 = vmatprep.subr.mxu0 0.0
    %98 = vmatpush1.msra.mxu0 0.0
    %99 = vmatprep.subr.mxu0 0.0
    %100 = vmatpush1.msra.mxu0 0.0
    %101 = vmatprep.subr.mxu0 0.0
    %102 = vmatpush1.msra.mxu0 0.0
    %103 = vmatprep.subr.mxu0 0.0
    %104 = vmatpush1.msra.mxu0 0.0
    %105 = vmatprep.subr.mxu0 0.0
    %106 = vmatpush1.msra.mxu0 0.0
    %107 = vmatprep.subr.mxu0 0.0
    %108 = vmatpush1.msra.mxu0 0.0
    %109 = vmatprep.subr.mxu0 0.0
    %110 = vmatpush1.msra.mxu0 0.0
    %111 = vmatprep.subr.mxu0 0.0
    %112 = vmatpush1.msra.mxu0 0.0
    %113 = vmatprep.subr.mxu0 0.0
    %114 = vmatpush1.msra.mxu0 0.0
    %115 = vmatprep.subr.mxu0 0.0
    %116 = vmatpush1.msra.mxu0 0.0
    %117 = vmatprep.subr.mxu0 0.0
    %118 = vmatpush1.msra.mxu0 0.0
    %119 = vmatprep.subr.mxu0 0.0
    %120 = vmatpush1.msra.mxu0 0.0
    %121 = vmatprep.mubr.f32.mxu0 0.0
    %122 = vmatmul.mubr.f32.gmra.mrb[0].mxu0 %v55
    %v123 = vpop.f32.mrb[0].mxu0
    %v124 = vadd.f32 %v51, %v123
    %v125 = vpop.f32.mrb[0].mxu0
    %126 = vdwg.mxu0
    %v127 = vtanh.pop %v124
    %v128 = vld [vmem:[%s3] sm:$0xff]
    %v129 = vld [vmem:[%s3 + $0x8] sm:$0xff]
    %v130 = vld [vmem:[%s3 + $0x10] sm:$0xff]
    %v131 = vld [vmem:[%s3 + $0x18] sm:$0xff]
    %v132 = vld [vmem:[%s3 + $0x20] sm:$0xff]
    %v133 = vld [vmem:[%s3 + $0x28] sm:$0xff]
    %v134 = vld [vmem:[%s3 + $0x30] sm:$0xff]
    %v135 = vld [vmem:[%s3 + $0x38] sm:$0xff]
    %v136 = vld [vmem:[%s4] sm:$0x1]
    %v138 = vlaneseq
    %v139 = vshrl.u32 %v138, 7
    %v140 = vsub.s32 0, %v139
    %v141 = vrot.slane %v136, %v140
    %vm143 = vcmask 523264
    %v145 = vsel %vm143, %v127, 0
    %147 = vmatprep.subr.mxu0 0.0
    %148 = vmatpush1.msra.mxu0 %v128
    %149 = vmatprep.subr.mxu0 0.0
    %150 = vmatpush1.msra.mxu0 %v129
    %151 = vmatprep.subr.mxu0 0.0
    %152 = vmatpush1.msra.mxu0 %v130
    %153 = vmatprep.subr.mxu0 0.0
    %154 = vmatpush1.msra.mxu0 %v131
    %155 = vmatprep.subr.mxu0 0.0
    %156 = vmatpush1.msra.mxu0 %v132
    %157 = vmatprep.subr.mxu0 0.0
    %158 = vmatpush1.msra.mxu0 %v133
    %159 = vmatprep.subr.mxu0 0.0
    %160 = vmatpush1.msra.mxu0 %v134
    %161 = vmatprep.subr.mxu0 0.0
    %162 = vmatpush1.msra.mxu0 %v135
    %163 = vmatprep.subr.mxu0 0.0
    %164 = vmatpush1.msra.mxu0 0.0
    %165 = vmatprep.subr.mxu0 0.0
    %166 = vmatpush1.msra.mxu0 0.0
    %167 = vmatprep.subr.mxu0 0.0
    %168 = vmatpush1.msra.mxu0 0.0
    %169 = vmatprep.subr.mxu0 0.0
    %170 = vmatpush1.msra.mxu0 0.0
    %171 = vmatprep.subr.mxu0 0.0
    %172 = vmatpush1.msra.mxu0 0.0
    %173 = vmatprep.subr.mxu0 0.0
    %174 = vmatpush1.msra.mxu0 0.0
    %175 = vmatprep.subr.mxu0 0.0
    %176 = vmatpush1.msra.mxu0 0.0
    %177 = vmatprep.subr.mxu0 0.0
    %178 = vmatpush1.msra.mxu0 0.0
    %179 = vmatprep.subr.mxu0 0.0
    %180 = vmatpush1.msra.mxu0 0.0
    %181 = vmatprep.subr.mxu0 0.0
    %182 = vmatpush1.msra.mxu0 0.0
    %183 = vmatprep.subr.mxu0 0.0
    %184 = vmatpush1.msra.mxu0 0.0
    %185 = vmatprep.subr.mxu0 0.0
    %186 = vmatpush1.msra.mxu0 0.0
    %187 = vmatprep.subr.mxu0 0.0
    %188 = vmatpush1.msra.mxu0 0.0
    %189 = vmatprep.subr.mxu0 0.0
    %190 = vmatpush1.msra.mxu0 0.0
    %191 = vmatprep.subr.mxu0 0.0
    %192 = vmatpush1.msra.mxu0 0.0
    %193 = vmatprep.subr.mxu0 0.0
    %194 = vmatpush1.msra.mxu0 0.0
    %195 = vmatprep.subr.mxu0 0.0
    %196 = vmatpush1.msra.mxu0 0.0
    %197 = vmatprep.subr.mxu0 0.0
    %198 = vmatpush1.msra.mxu0 0.0
    %199 = vmatprep.subr.mxu0 0.0
    %200 = vmatpush1.msra.mxu0 0.0
    %201 = vmatprep.subr.mxu0 0.0
    %202 = vmatpush1.msra.mxu0 0.0
    %203 = vmatprep.subr.mxu0 0.0
    %204 = vmatpush1.msra.mxu0 0.0
    %205 = vmatprep.subr.mxu0 0.0
    %206 = vmatpush1.msra.mxu0 0.0
    %207 = vmatprep.subr.mxu0 0.0
    %208 = vmatpush1.msra.mxu0 0.0
    %209 = vmatprep.subr.mxu0 0.0
    %210 = vmatpush1.msra.mxu0 0.0
    %211 = vmatprep.mubr.f32.mxu0 0.0
    %212 = vmatmul.mubr.f32.gmra.mrb[0].mxu0 %v145
    %v213 = vpop.f32.mrb[0].mxu0
    %v214 = vadd.f32 %v141, %v213
    %v215 = vpop.f32.mrb[0].mxu0
    %216 = vdwg.mxu0
    %v217 = vtanh.pop %v214
    %v218 = vld [vmem:[%s5] sm:$0xff]
    %v219 = vld [vmem:[%s5 + $0x8] sm:$0xff]
    %v220 = vld [vmem:[%s5 + $0x10] sm:$0xff]
    %v221 = vld [vmem:[%s5 + $0x18] sm:$0xff]
    %v222 = vld [vmem:[%s5 + $0x20] sm:$0xff]
    %v223 = vld [vmem:[%s5 + $0x28] sm:$0xff]
    %v224 = vld [vmem:[%s5 + $0x30] sm:$0xff]
    %v225 = vld [vmem:[%s5 + $0x38] sm:$0xff]
    %v226 = vld [vmem:[%s6] sm:$0x1]
    %v228 = vlaneseq
    %v229 = vshrl.u32 %v228, 7
    %v230 = vsub.s32 0, %v229
    %v231 = vrot.slane %v226, %v230
    %v234 = vsel %vm143, %v217, 0
    %236 = vmatprep.subr.mxu0 0.0
    %237 = vmatpush1.msra.mxu0 %v218
    %238 = vmatprep.subr.mxu0 0.0
    %239 = vmatpush1.msra.mxu0 %v219
    %240 = vmatprep.subr.mxu0 0.0
    %241 = vmatpush1.msra.mxu0 %v220
    %242 = vmatprep.subr.mxu0 0.0
    %243 = vmatpush1.msra.mxu0 %v221
    %244 = vmatprep.subr.mxu0 0.0
    %245 = vmatpush1.msra.mxu0 %v222
    %246 = vmatprep.subr.mxu0 0.0
    %247 = vmatpush1.msra.mxu0 %v223
    %248 = vmatprep.subr.mxu0 0.0
    %249 = vmatpush1.msra.mxu0 %v224
    %250 = vmatprep.subr.mxu0 0.0
    %251 = vmatpush1.msra.mxu0 %v225
    %252 = vmatprep.subr.mxu0 0.0
    %253 = vmatpush1.msra.mxu0 0.0
    %254 = vmatprep.subr.mxu0 0.0
    %255 = vmatpush1.msra.mxu0 0.0
    %256 = vmatprep.subr.mxu0 0.0
    %257 = vmatpush1.msra.mxu0 0.0
    %258 = vmatprep.subr.mxu0 0.0
    %259 = vmatpush1.msra.mxu0 0.0
    %260 = vmatprep.subr.mxu0 0.0
    %261 = vmatpush1.msra.mxu0 0.0
    %262 = vmatprep.subr.mxu0 0.0
    %263 = vmatpush1.msra.mxu0 0.0
    %264 = vmatprep.subr.mxu0 0.0
    %265 = vmatpush1.msra.mxu0 0.0
    %266 = vmatprep.subr.mxu0 0.0
    %267 = vmatpush1.msra.mxu0 0.0
    %268 = vmatprep.subr.mxu0 0.0
    %269 = vmatpush1.msra.mxu0 0.0
    %270 = vmatprep.subr.mxu0 0.0
    %271 = vmatpush1.msra.mxu0 0.0
    %272 = vmatprep.subr.mxu0 0.0
    %273 = vmatpush1.msra.mxu0 0.0
    %274 = vmatprep.subr.mxu0 0.0
    %275 = vmatpush1.msra.mxu0 0.0
    %276 = vmatprep.subr.mxu0 0.0
    %277 = vmatpush1.msra.mxu0 0.0
    %278 = vmatprep.subr.mxu0 0.0
    %279 = vmatpush1.msra.mxu0 0.0
    %280 = vmatprep.subr.mxu0 0.0
    %281 = vmatpush1.msra.mxu0 0.0
    %282 = vmatprep.subr.mxu0 0.0
    %283 = vmatpush1.msra.mxu0 0.0
    %284 = vmatprep.subr.mxu0 0.0
    %285 = vmatpush1.msra.mxu0 0.0
    %286 = vmatprep.subr.mxu0 0.0
    %287 = vmatpush1.msra.mxu0 0.0
    %288 = vmatprep.subr.mxu0 0.0
    %289 = vmatpush1.msra.mxu0 0.0
    %290 = vmatprep.subr.mxu0 0.0
    %291 = vmatpush1.msra.mxu0 0.0
    %292 = vmatprep.subr.mxu0 0.0
    %293 = vmatpush1.msra.mxu0 0.0
    %294 = vmatprep.subr.mxu0 0.0
    %295 = vmatpush1.msra.mxu0 0.0
    %296 = vmatprep.subr.mxu0 0.0
    %297 = vmatpush1.msra.mxu0 0.0
    %298 = vmatprep.subr.mxu0 0.0
    %299 = vmatpush1.msra.mxu0 0.0
    %300 = vmatprep.mubr.f32.mxu0 0.0
    %301 = vmatmul.mubr.f32.gmra.mrb[0].mxu0 %v234
    %v302 = vpop.f32.mrb[0].mxu0
    %v303 = vadd.f32 %v231, %v302
    %v304 = vpop.f32.mrb[0].mxu0
    %305 = vdwg.mxu0
    %vm306 = vcmask 130048
    %307 = vst.msk [vmem:[#allocation5] sm:$0xff] %vm306, %v303
    // Predicated region
    $region34: #{tpu_custom_call.1} parent=1 // pred_check
      _
    $region35: #{tpu_custom_call.1} parent=1 // pred_check_branch
      %309 = sbr.rel (0) target = $region37
    $region36: #{tpu_custom_call.1} parent=1 // pred_region
      %s311 = ssub.s32 128, 128
      %312 = vsyncadd [#allocation4], %s311
      %s314 = sshll.u32 [#allocation5], 4
      %s315 = int_to_ptr.vmem [resolvable:$true] %s314
      %317 = dma.vmem_to_hbm [thread:$0]  %s315, 128, %s7, [#allocation4]
    $region37: #{tpu_custom_call.1} parent=1 // pred_fallthru
      _
    // Predicated region
    $region38: #{tpu_custom_call.1} parent=1 // pred_check
      _
    $region39: #{tpu_custom_call.1} parent=1 // pred_check_branch
      %319 = sbr.rel (0) target = $region41
    $region40: #{tpu_custom_call.1} parent=1 // pred_region
      %320 = dma.done [#allocation4], 128
    $region41: #{tpu_custom_call.1} parent=1 // pred_fallthru
      _
    %321 = vsyncpa [#allocation3], 1
    %322 = vsyncpa [#allocation4], 1

</llo_original>
